<compile_context>
chip_gen: v7x
topology: tpu7x:2x2x1
jax: 0.10.0
libtpu: 0.0.40
codegen_flags: <defaults>
</compile_context>

<pallas_src>
import functools

import jax
import jax.numpy as jnp
from jax.experimental import pallas as pl
from jax.experimental.pallas import tpu as pltpu

_LANES = 128
_SUBLANES = 8
_ROW_QUANT = 16            # tile_rows kept a multiple of 16 (covers bf16 (16,128) tiling)
_MAX_TILE_BYTES = 1 << 20  # ~1 MiB per input per pipeline buffer
_NCORES = 2                # split reduction into 2 contiguous halves (sharded on 2-TC chips)


def _partial_sq_sum_kernel(p_ref, t_ref, o_ref, acc_ref, *, nblocks, k_steps, needs_skip):
    k = pl.program_id(1)

    @pl.when(k == 0)
    def _init():
        acc_ref[...] = jnp.zeros_like(acc_ref)

    tile_rows = p_ref.shape[0]
    chunk_rows = 64 if tile_rows % 64 == 0 else (32 if tile_rows % 32 == 0 else 16)
    n_chunks = tile_rows // chunk_rows

    def accumulate():
        # Chunked accumulation: bounds live vregs (no tile-sized temporaries),
        # no masks, pure VPU work: cast, sub, mul, sublane-group adds.
        def body(i, acc):
            start = pl.multiple_of(i * chunk_rows, chunk_rows)
            p = p_ref[pl.ds(start, chunk_rows), :].astype(jnp.float32)
            t = t_ref[pl.ds(start, chunk_rows), :].astype(jnp.float32)
            d = p - t
            sq = d * d
            return acc + sq.reshape(chunk_rows // _SUBLANES, _SUBLANES, _LANES).sum(axis=0)

        part = jax.lax.fori_loop(0, n_chunks, body,
                                 jnp.zeros((_SUBLANES, _LANES), jnp.float32))
        acc_ref[...] += part

    if needs_skip:
        # Duplicate (clamped) blocks only exist when nblocks is odd; skip them so
        # the last valid block is not double counted.
        c = pl.program_id(0)
        b = c * k_steps + k
        pl.when(b < nblocks)(accumulate)
    else:
        accumulate()

    @pl.when(k == pl.num_programs(1) - 1)
    def _finalize():
        o_ref[...] = acc_ref[...].reshape(o_ref.shape)


def _sq_diff_sum_jax(p, t):
    d = p.astype(jnp.float32) - t.astype(jnp.float32)
    return jnp.sum(d * d)


def rmse_loss(predicted, target):
    """sqrt(mean((predicted - target)**2)) — matches torch.sqrt(nn.MSELoss()(p, t))."""
    assert predicted.shape == target.shape, "shapes must match (no broadcasting)"
    n = int(predicted.size)
    assert n > 0, "RMSELoss on empty input (would divide by zero)"
    inv_n = 1.0 / float(n)

    p_flat = predicted.reshape(-1)
    t_flat = target.reshape(-1)

    itemsize = int(jnp.dtype(predicted.dtype).itemsize)
    max_rows = max(64, (_MAX_TILE_BYTES // (_LANES * max(1, itemsize))) // 64 * 64)

    rows_total = n // _LANES
    tile_rows = min(max_rows, (rows_total // _ROW_QUANT) * _ROW_QUANT)

    if tile_rows == 0:
        # Too small for even one (16,128) tile: plain JAX is already optimal here.
        return jnp.sqrt(_sq_diff_sum_jax(p_flat, t_flat) * inv_n)

    nblocks = rows_total // tile_rows           # whole tiles streamed by the kernel
    n_kernel = nblocks * tile_rows * _LANES     # elements covered by the kernel

    # 2-D lane-dense view of the inputs. When n % 128 == 0 this reshape is a free
    # bitcast of the original buffers (no HBM copy); the kernel then only reads
    # the first nblocks*tile_rows rows via BlockSpec. Only when n % 128 != 0 is a
    # prefix slice materialized (no full padded copies in either case).
    if n % _LANES == 0:
        p2 = p_flat.reshape(rows_total, _LANES)
        t2 = t_flat.reshape(rows_total, _LANES)
    else:
        head = rows_total * _LANES
        p2 = p_flat[:head].reshape(rows_total, _LANES)
        t2 = t_flat[:head].reshape(rows_total, _LANES)

    ncores = min(_NCORES, nblocks)
    k_steps = pl.cdiv(nblocks, ncores)
    needs_skip = (ncores * k_steps) != nblocks

    def in_map(c, k):
        # Contiguous half per core; out-of-range block ids (only when nblocks is
        # odd) clamp onto the previous step's block -> DMA elided, and their
        # accumulation is skipped in-kernel.
        return (jnp.minimum(c * k_steps + k, nblocks - 1), 0)

    kernel = functools.partial(_partial_sq_sum_kernel, nblocks=nblocks,
                               k_steps=k_steps, needs_skip=needs_skip)

    partial_sums = pl.pallas_call(
        kernel,
        out_shape=jax.ShapeDtypeStruct((ncores, _SUBLANES, _LANES), jnp.float32),
        grid_spec=pltpu.PrefetchScalarGridSpec(
            num_scalar_prefetch=0,
            grid=(ncores, k_steps),
            in_specs=[
                pl.BlockSpec((tile_rows, _LANES), in_map),
                pl.BlockSpec((tile_rows, _LANES), in_map),
            ],
            out_specs=pl.BlockSpec((1, _SUBLANES, _LANES), lambda c, k: (c, 0, 0)),
            scratch_shapes=[pltpu.VMEM((_SUBLANES, _LANES), jnp.float32)],
        ),
        compiler_params=pltpu.CompilerParams(
            dimension_semantics=("parallel", "arbitrary"),
            # ~4 MiB of double-buffered pipeline VMEM: default limits are fine
            # on every generation (incl. v7x's 64 MiB physical VMEM).
        ),
        cost_estimate=pl.CostEstimate(
            flops=3 * n_kernel,
            transcendentals=0,
            bytes_accessed=2 * n_kernel * itemsize,
        ),
    )(p2, t2)

    total = jnp.sum(partial_sums)
    if n_kernel < n:
        # Tail (< one tile + < 128 elements): tiny plain-JAX squared-diff sum.
        total = total + _sq_diff_sum_jax(p_flat[n_kernel:], t_flat[n_kernel:])
    return jnp.sqrt(total * inv_n)


if __name__ == "__main__":
    key = jax.random.PRNGKey(0)
    kp, kt = jax.random.split(key)
    # NCHW inputs, small shapes
    B, C, H, W = 2, 4, 16, 16
    predicted = jax.random.normal(kp, (B, C, H, W), dtype=jnp.float32)
    target = jax.random.normal(kt, (B, C, H, W), dtype=jnp.float32)

    loss = rmse_loss(predicted, target)
    jax.block_until_ready(loss)

    # sanity check against plain-JAX reference
    ref = jnp.sqrt(jnp.mean((predicted - target) ** 2))
    assert jnp.allclose(loss, ref, rtol=1e-5, atol=1e-6), (loss, ref)

    print("KERNEL_OK")
</pallas_src>

<mosaic_0001>
module attributes {stable_mosaic.version = 11 : i64} {
  func.func @_partial_sq_sum_kernel(%arg0: i32, %arg1: i32, %arg2: memref<16x128xf32, #tpu.memory_space<vmem>>, %arg3: memref<16x128xf32, #tpu.memory_space<vmem>>, %arg4: memref<1x8x128xf32, #tpu.memory_space<vmem>>, %arg5: memref<8x128xf32, #tpu.memory_space<vmem>>) attributes {dimension_semantics = [#tpu.dimension_semantics<parallel>, #tpu.dimension_semantics<arbitrary>], iteration_bounds = array<i64: 1, 1>, scalar_prefetch = 0 : i64, scratch_operands = 1 : i64, tpu.core_type = #tpu.core_type<tc>, window_params = [{transform_indices = @transform_0, window_bounds = array<i64: 16, 128>}, {transform_indices = @transform_1, window_bounds = array<i64: 16, 128>}, {transform_indices = @transform_2, window_bounds = array<i64: 1, 8, 128>}]} {
    %c0_i32 = arith.constant 0 : i32
    %0 = arith.cmpi eq, %arg1, %c0_i32 : i32
    %1 = arith.extui %0 : i1 to i32
    %c0_i32_0 = arith.constant 0 : i32
    %2 = arith.cmpi ne, %1, %c0_i32_0 : i32
    scf.if %2 {
      %cst_10 = arith.constant 0.000000e+00 : f32
      %21 = vector.broadcast %cst_10 : f32 to vector<8x128xf32>
      %c0_11 = arith.constant 0 : index
      %c0_12 = arith.constant 0 : index
      %22 = vector.load %arg5[%c0_11, %c0_12] : memref<8x128xf32, #tpu.memory_space<vmem>>, vector<8x128xf32>
      tpu.vector_store %arg5[%c0_11, %c0_12], %21 {strides = array<i32>} : memref<8x128xf32, #tpu.memory_space<vmem>>, vector<8x128xf32>,
    } else {
    }
    %cst = arith.constant 0.000000e+00 : f32
    %3 = vector.broadcast %cst : f32 to vector<8x128xf32>
    %c0_i32_1 = arith.constant 0 : i32
    %c16_i32 = arith.constant 16 : i32
    %4 = arith.muli %c0_i32_1, %c16_i32 : i32
    %5 = tpu.assume_multiple %4, 16 : i32
    %6 = arith.index_cast %5 : i32 to index
    %c0 = arith.constant 0 : index
    %7 = vector.load %arg2[%6, %c0] : memref<16x128xf32, #tpu.memory_space<vmem>>, vector<16x128xf32>
    %8 = arith.index_cast %5 : i32 to index
    %c0_2 = arith.constant 0 : index
    %9 = vector.load %arg3[%8, %c0_2] : memref<16x128xf32, #tpu.memory_space<vmem>>, vector<16x128xf32>
    %10 = arith.subf %7, %9 : vector<16x128xf32>
    %11 = arith.mulf %10, %10 : vector<16x128xf32>
    %12 = vector.shape_cast %11 : vector<16x128xf32> to vector<2x8x128xf32>
    %cst_3 = arith.constant dense<0.000000e+00> : vector<8x128xf32>
    %13 = vector.multi_reduction <add>, %12, %cst_3 [0] : vector<2x8x128xf32> to vector<8x128xf32>
    %14 = arith.addf %3, %13 : vector<8x128xf32>
    %c1_i32 = arith.constant 1 : i32
    %c0_4 = arith.constant 0 : index
    %c0_5 = arith.constant 0 : index
    %15 = vector.load %arg5[%c0_4, %c0_5] : memref<8x128xf32, #tpu.memory_space<vmem>>, vector<8x128xf32>
    %16 = arith.addf %15, %14 : vector<8x128xf32>
    %c0_6 = arith.constant 0 : index
    %c0_7 = arith.constant 0 : index
    %17 = vector.load %arg5[%c0_6, %c0_7] : memref<8x128xf32, #tpu.memory_space<vmem>>, vector<8x128xf32>
    tpu.vector_store %arg5[%c0_6, %c0_7], %16 {strides = array<i32>} : memref<8x128xf32, #tpu.memory_space<vmem>>, vector<8x128xf32>,
    %c0_i32_8 = arith.constant 0 : i32
    %18 = arith.cmpi eq, %arg1, %c0_i32_8 : i32
    %19 = arith.extui %18 : i1 to i32
    %c0_i32_9 = arith.constant 0 : i32
    %20 = arith.cmpi ne, %19, %c0_i32_9 : i32
    scf.if %20 {
      %c0_10 = arith.constant 0 : index
      %c0_11 = arith.constant 0 : index
      %21 = vector.load %arg5[%c0_10, %c0_11] : memref<8x128xf32, #tpu.memory_space<vmem>>, vector<8x128xf32>
      %22 = vector.shape_cast %21 : vector<8x128xf32> to vector<1x8x128xf32>
      %c0_12 = arith.constant 0 : index
      %c0_13 = arith.constant 0 : index
      %c0_14 = arith.constant 0 : index
      %23 = vector.load %arg4[%c0_12, %c0_13, %c0_14] : memref<1x8x128xf32, #tpu.memory_space<vmem>>, vector<1x8x128xf32>
      tpu.vector_store %arg4[%c0_12, %c0_13, %c0_14], %22 {strides = array<i32>} : memref<1x8x128xf32, #tpu.memory_space<vmem>>, vector<1x8x128xf32>,
    } else {
    }
    return
  }
  func.func @transform_0(%arg0: i32, %arg1: i32) -> (i32, i32) {
    %c1_i32 = arith.constant 1 : i32
    %0 = arith.muli %arg0, %c1_i32 : i32
    %1 = arith.addi %0, %arg1 : i32
    %c0_i32 = arith.constant 0 : i32
    %2 = arith.minsi %1, %c0_i32 : i32
    %c0_i32_0 = arith.constant 0 : i32
    %c0_i32_1 = arith.constant 0 : i32
    return %2, %c0_i32_0 : i32, i32
  }
  func.func @transform_1(%arg0: i32, %arg1: i32) -> (i32, i32) {
    %c1_i32 = arith.constant 1 : i32
    %0 = arith.muli %arg0, %c1_i32 : i32
    %1 = arith.addi %0, %arg1 : i32
    %c0_i32 = arith.constant 0 : i32
    %2 = arith.minsi %1, %c0_i32 : i32
    %c0_i32_0 = arith.constant 0 : i32
    %c0_i32_1 = arith.constant 0 : i32
    return %2, %c0_i32_0 : i32, i32
  }
  func.func @transform_2(%arg0: i32, %arg1: i32) -> (i32, i32, i32) {
    %c0_i32 = arith.constant 0 : i32
    %c0_i32_0 = arith.constant 0 : i32
    %c0_i32_1 = arith.constant 0 : i32
    return %arg0, %c0_i32, %c0_i32_0 : i32, i32, i32
  }
}

</mosaic_0001>

<llo_original>
// kernel: tpu_custom_call.1
$region0: #{tpu_custom_call.1}
  #allocation0 [shape = 'u32[]', space=smem, size = 0x4, offset = 0x4, fixed_abs, tag = 'smem constant byte address 0x4 - core index']
  #allocation1 [shape = 'u32[144,128]{1,0:T(1,128)}', space=vmem, size = 0x12000, scoped, tag = 'internal scratch']
  #allocation2 [shape = 'f32[8,128]{1,0:T(8,128)}', space=vmem, size = 0x1000, scoped, tag = 'scratch operand']
  %s0 = inlined_call_operand.hbm [shape: f32[16,128], index: 0, kind: input, shape index: {}]
  %s1 = inlined_call_operand.hbm [shape: f32[16,128], index: 1, kind: input, shape index: {}]
  %s2 = inlined_call_operand.hbm [shape: f32[1,8,128], index: 2, kind: output, shape index: {}]
  %s3 = sld [smem:[#allocation0]]
  $region34: #{tpu_custom_call.1} parent=0
    _
  %s5 = ssub.s32 1, %s3
  %s6 = scalar_select 0, %s5, %s3
  $region1: #{tpu_custom_call.1} parent=0
    #allocation3 [shape = 'u8[8192]{0}', space=vmem, size = 0x2000, scoped, tag = 'input window, operand 0, single buffered']
    #allocation4 [shape = 's32[1]{0}', space=sflag, size = 0x4, scoped, tag = 'scoped memory for tpu_custom_call.1']
    #allocation5 [shape = 's32[1]{0}', space=sflag, size = 0x4, scoped, tag = 'scoped memory for tpu_custom_call.1']
    #allocation6 [shape = 'u8[8192]{0}', space=vmem, size = 0x2000, scoped, tag = 'input window, operand 1, single buffered']
    #allocation7 [shape = 's32[1]{0}', space=sflag, size = 0x4, scoped, tag = 'scoped memory for tpu_custom_call.1']
    #allocation8 [shape = 'u8[4096]{0}', space=vmem, size = 0x1000, scoped, tag = 'output window, operand 0, single buffered']
    %7 = vsyncpa [#allocation4], 0
    %8 = vsyncpa [#allocation7], 0
    %9 = vsyncpa [#allocation5], 0
    // Predicated region
    $region2: #{tpu_custom_call.1} parent=1 // pred_check
      _
    $region3: #{tpu_custom_call.1} parent=1 // pred_check_branch
      %11 = sbr.rel (0) target = $region5
    $region4: #{tpu_custom_call.1} parent=1 // pred_region
      %s12 = sadd.s32 0, 0
      %p13 = scmp.lt.s32.totalorder %s12, 0
      %s14 = scalar_select %p13, %s12, 0
      %s15 = smul.u32 2, %s14
      %s17 = ssub.s32 256, 256
      %18 = vsyncadd [#allocation4], %s17
      %s19 = smul.addr %s15, 128
      %s20 = scalar_lea.hbm %s0, %s19
      %s21 = sshll.u32 [#allocation3], 4
      %s22 = int_to_ptr.vmem [resolvable:$true] %s21
      %27 = dma.hbm_to_vmem [thread:$0]  %s20, 256, %s22, [#allocation4], 128, 128, 8
    $region5: #{tpu_custom_call.1} parent=1 // pred_fallthru
      _
    // Predicated region
    $region6: #{tpu_custom_call.1} parent=1 // pred_check
      _
    $region7: #{tpu_custom_call.1} parent=1 // pred_check_branch
      %29 = sbr.rel (0) target = $region9
    $region8: #{tpu_custom_call.1} parent=1 // pred_region
      %s30 = sadd.s32 0, 0
      %p31 = scmp.lt.s32.totalorder %s30, 0
      %s32 = scalar_select %p31, %s30, 0
      %s33 = smul.u32 2, %s32
      %s35 = ssub.s32 256, 256
      %36 = vsyncadd [#allocation7], %s35
      %s37 = smul.addr %s33, 128
      %s38 = scalar_lea.hbm %s1, %s37
      %s39 = sshll.u32 [#allocation6], 4
      %s40 = int_to_ptr.vmem [resolvable:$true] %s39
      %45 = dma.hbm_to_vmem [thread:$0]  %s38, 256, %s40, [#allocation7], 128, 128, 8
    $region9: #{tpu_custom_call.1} parent=1 // pred_fallthru
      _
    // Predicated region
    $region10: #{tpu_custom_call.1} parent=1 // pred_check
      _
    $region11: #{tpu_custom_call.1} parent=1 // pred_check_branch
      %47 = sbr.rel (0) target = $region13
    $region12: #{tpu_custom_call.1} parent=1 // pred_region
      %48 = dma.done [#allocation4], 256
    $region13: #{tpu_custom_call.1} parent=1 // pred_fallthru
      _
    // Predicated region
    $region14: #{tpu_custom_call.1} parent=1 // pred_check
      _
    $region15: #{tpu_custom_call.1} parent=1 // pred_check_branch
      %50 = sbr.rel (0) target = $region17
    $region16: #{tpu_custom_call.1} parent=1 // pred_region
      %51 = dma.done [#allocation7], 256
    $region17: #{tpu_custom_call.1} parent=1 // pred_fallthru
      _
    %s52 = sadd.s32 0, 0
    %p53 = scmp.lt.s32.totalorder %s52, 0
    %s54 = scalar_select %p53, %s52, 0
    %s55 = smul.u32 2, %s54
    %s56 = sadd.s32 0, 0
    %p57 = scmp.lt.s32.totalorder %s56, 0
    %s58 = scalar_select %p57, %s56, 0
    %s59 = smul.u32 2, %s58
    %p60 = scmp.eq.s32.totalorder 0, 0
    // Predicated region
    $region18: #{tpu_custom_call.1} parent=1 // pred_check
      %p61 = pneg %p60
    $region19: #{tpu_custom_call.1} parent=1 // pred_check_branch
      %63 = sbr.rel (%p61) target = $region21
    $region20: #{tpu_custom_call.1} parent=1 // pred_region
      %64 = vst [vmem:[#allocation2] sm:$0xff] 0.0
    $region21: #{tpu_custom_call.1} parent=1 // pred_fallthru
      _
    %v65 = vld [vmem:[#allocation3] sm:$0xff]
    %v66 = vld [vmem:[#allocation3 + $0x8] sm:$0xff]
    %v67 = vld [vmem:[#allocation6] sm:$0xff]
    %v68 = vld [vmem:[#allocation6 + $0x8] sm:$0xff]
    %v69 = vsub.f32 %v65, %v67
    %v70 = vsub.f32 %v66, %v68
    %v71 = vmul.f32 %v69, %v69
    %v72 = vmul.f32 %v70, %v70
    %v73 = vadd.f32 %v71, %v72
    %v74 = vadd.f32 %v73, 0.0
    %v75 = vld [vmem:[#allocation2] sm:$0xff]
    %v76 = vadd.f32 %v75, %v74
    %77 = vst [vmem:[#allocation2] sm:$0xff] %v76
    // Predicated region
    $region22: #{tpu_custom_call.1} parent=1 // pred_check
      %p78 = pneg %p60
    $region23: #{tpu_custom_call.1} parent=1 // pred_check_branch
      %80 = sbr.rel (%p78) target = $region25
    $region24: #{tpu_custom_call.1} parent=1 // pred_region
      %v81 = vld [vmem:[#allocation2] sm:$0xff]
      %82 = vst [vmem:[#allocation8] sm:$0xff] %v81
    $region25: #{tpu_custom_call.1} parent=1 // pred_fallthru
      _
    // Predicated region
    $region26: #{tpu_custom_call.1} parent=1 // pred_check
      _
    $region27: #{tpu_custom_call.1} parent=1 // pred_check_branch
      %84 = sbr.rel (0) target = $region29
    $region28: #{tpu_custom_call.1} parent=1 // pred_region
      %s86 = ssub.s32 128, 128
      %87 = vsyncadd [#allocation5], %s86
      %s89 = sshll.u32 [#allocation8], 4
      %s90 = int_to_ptr.vmem [resolvable:$true] %s89
      %92 = dma.vmem_to_hbm [thread:$0]  %s90, 128, %s2, [#allocation5]
    $region29: #{tpu_custom_call.1} parent=1 // pred_fallthru
      _
    // Predicated region
    $region30: #{tpu_custom_call.1} parent=1 // pred_check
      _
    $region31: #{tpu_custom_call.1} parent=1 // pred_check_branch
      %94 = sbr.rel (0) target = $region33
    $region32: #{tpu_custom_call.1} parent=1 // pred_region
      %95 = dma.done [#allocation5], 128
    $region33: #{tpu_custom_call.1} parent=1 // pred_fallthru
      _
    %96 = vsyncpa [#allocation4], 1
    %97 = vsyncpa [#allocation7], 1
    %98 = vsyncpa [#allocation5], 1

</llo_original>
